<compile_context>
chip_gen: v6e
topology: v6e:2x2x1
jax: 0.10.0
libtpu: 0.0.40
codegen_flags: <defaults>
</compile_context>

<pallas_src>
import functools

import jax
import jax.numpy as jnp
from jax.experimental import pallas as pl
from jax.experimental.pallas import tpu as pltpu

HIDDEN = 256   # per-branch hidden width (a1 / c1)
LANE = 128     # TPU lane width


def _round_up(n, m):
    return ((n + m - 1) // m) * m


def _relu6(x):
    return jnp.clip(x, 0.0, 6.0)


def _softplus(x):
    # numerically stable softplus: max(x,0) + log1p(exp(-|x|))
    return jnp.maximum(x, 0.0) + jnp.log1p(jnp.exp(-jnp.abs(x)))


def _net_kernel(a_dim, act_lanes,
                x_ref, wh_ref, bh_ref, whead_ref, bhead_ref, out_ref):
    x = x_ref[...]                                                   # [TB, s_dim]

    # Fused hidden layer: one MXU pass (a1 | c1 side by side), f32 accumulate.
    h = jnp.dot(x, wh_ref[...], preferred_element_type=jnp.float32)  # [TB, 512]
    h = _relu6(h + bh_ref[...])
    # No-op in the f32 default; feeds the MXU as bf16 on the opt-in bf16 path.
    h = h.astype(whead_ref.dtype)

    # Fused block-diagonal head matmul: mu | sigma | v in one MXU pass.
    z = jnp.dot(h, whead_ref[...], preferred_element_type=jnp.float32)
    z = z + bhead_ref[...]                                            # [TB, head_pad]

    head_pad = z.shape[1]

    # Only the first `act_lanes` lanes contain mu/sigma columns; anything past
    # that (only possible when head_pad > 128) is pure pass-through -> skip the
    # transcendentals there (EUP is the binding compute unit, 1 per chip).
    if act_lanes < head_pad:
        z_act, z_rest = z[:, :act_lanes], z[:, act_lanes:]
    else:
        z_act, z_rest = z, None

    # Per-column activation select. Column predicate is a (1, act_lanes) iota
    # broadcast by jnp.where (not a full [TB, act_lanes] iota) and the selects
    # fold in-place to keep the number of live [TB,128] temporaries small.
    col = jax.lax.broadcasted_iota(jnp.int32, (1, z_act.shape[1]), 1)
    out = jnp.where(col < 2 * a_dim, _softplus(z_act) + 0.001, z_act)  # sigma | v/pad
    out = jnp.where(col < a_dim, 2.0 * jnp.tanh(z_act), out)          # mu

    if z_rest is not None:
        out = jnp.concatenate([out, z_rest], axis=1)

    out_ref[...] = out.astype(out_ref.dtype)                          # one lane-dense store


def pack_params(params, weight_dtype=jnp.float32):
    """Fuse per-layer weights into the kernel layout.

    weight_dtype=jnp.bfloat16 halves weight/x DMA and resident VMEM on
    v5e/v6e/v7x (MXU is bf16-native, accumulation stays f32); kept f32 by
    default to preserve 1e-5 agreement with the reference.
    """
    s_dim = params["wa1"].shape[0]
    a_dim = params["wmu"].shape[1]
    head_w = 2 * a_dim + 1
    head_pad = _round_up(head_w, LANE)          # lane-dense head width

    # Hidden: [s_dim, 512] = [wa1 | wc1],  bias [1, 512]
    wh = jnp.concatenate([params["wa1"], params["wc1"]], axis=1).astype(weight_dtype)
    bh = jnp.concatenate([params["ba1"], params["bc1"]], axis=1).astype(jnp.float32)

    # Heads: block-diagonal [512, head_pad]
    whead = jnp.zeros((2 * HIDDEN, head_pad), weight_dtype)
    whead = whead.at[:HIDDEN, :a_dim].set(params["wmu"].astype(weight_dtype))
    whead = whead.at[:HIDDEN, a_dim:2 * a_dim].set(params["wsg"].astype(weight_dtype))
    whead = whead.at[HIDDEN:, 2 * a_dim:2 * a_dim + 1].set(params["wv"].astype(weight_dtype))

    bhead = jnp.zeros((1, head_pad), jnp.float32)
    bhead = bhead.at[:, :a_dim].set(params["bmu"])
    bhead = bhead.at[:, a_dim:2 * a_dim].set(params["bsg"])
    bhead = bhead.at[:, 2 * a_dim:2 * a_dim + 1].set(params["bv"])

    return dict(wh=wh, bh=bh, whead=whead, bhead=bhead,
                s_dim=s_dim, a_dim=a_dim, head_pad=head_pad)


def _choose_tiling(B, block_b):
    """Pick (tile_b, b_pad, n_tiles).

    * tile is a multiple of 8 sublanes
    * tile is capped at half the (rounded) batch so the batch grid has >=2
      steps whenever the batch allows it (v7x 2-TC megacore sharding)
    * tile = ceil(B / n_tiles) so padding waste is <8 rows per tile instead of
      up to a full block_b tile.
    """
    b8 = _round_up(max(B, 1), 8)
    half = _round_up(-(-b8 // 2), 8)
    tb_cap = max(8, min(block_b, half))
    n_tiles = max(1, -(-b8 // tb_cap))
    tb = _round_up(-(-b8 // n_tiles), 8)
    return tb, n_tiles * tb, n_tiles


def net_forward(x, packed, *, block_b=1024):
    """x: [B, s_dim]. Returns (mu [B,a_dim], sigma [B,a_dim], values [B,1]) in f32."""
    B, s_dim = x.shape
    a_dim = packed["a_dim"]
    head_pad = packed["head_pad"]
    wh, bh = packed["wh"], packed["bh"]
    whead, bhead = packed["whead"], packed["bhead"]
    h2 = 2 * HIDDEN
    act_lanes = min(head_pad, _round_up(max(2 * a_dim, 1), LANE))

    tb, b_pad, n_tiles = _choose_tiling(B, block_b)
    if b_pad != B:
        x = jnp.pad(x, ((0, b_pad - B), (0, 0)))
    x = x.astype(wh.dtype)

    grid = (n_tiles,)

    flops = 2 * b_pad * (s_dim * h2 + h2 * head_pad)
    transcendentals = 3 * b_pad * act_lanes            # tanh + exp + log1p per lane
    bytes_accessed = (x.size * x.dtype.itemsize
                      + wh.size * wh.dtype.itemsize + whead.size * whead.dtype.itemsize
                      + bh.size * 4 + bhead.size * 4
                      + b_pad * head_pad * 4)

    # NOTE: wh/bh/whead/bhead use constant (0,0) index maps, so Mosaic fetches
    # them once and keeps them VMEM-resident across batch tiles; at these sizes
    # the default double-buffer allocation is negligible VMEM.
    out = pl.pallas_call(
        functools.partial(_net_kernel, a_dim, act_lanes),
        grid=grid,
        in_specs=[
            pl.BlockSpec((tb, s_dim), lambda i: (i, 0)),        # x tile (pipelined)
            pl.BlockSpec((s_dim, h2), lambda i: (0, 0)),        # fused hidden weight (resident)
            pl.BlockSpec((1, h2), lambda i: (0, 0)),            # fused hidden bias
            pl.BlockSpec((h2, head_pad), lambda i: (0, 0)),     # fused head weight (resident)
            pl.BlockSpec((1, head_pad), lambda i: (0, 0)),      # fused head bias
        ],
        out_specs=pl.BlockSpec((tb, head_pad), lambda i: (i, 0)),
        out_shape=jax.ShapeDtypeStruct((b_pad, head_pad), jnp.float32),
        compiler_params=pltpu.CompilerParams(
            dimension_semantics=("parallel",)),                 # shards batch tiles on v7x's 2 TCs
        cost_estimate=pl.CostEstimate(
            flops=flops,
            transcendentals=transcendentals,
            bytes_accessed=bytes_accessed),
    )(x, wh, bh, whead, bhead)

    out = out[:B]
    mu = out[:, :a_dim]
    sigma = out[:, a_dim:2 * a_dim]
    values = out[:, 2 * a_dim:2 * a_dim + 1]
    return mu, sigma, values


def init_params(key, s_dim, a_dim, hidden=HIDDEN):
    """Deterministic init mimicking nn.Linear default (uniform +/- 1/sqrt(fan_in))."""
    ks = jax.random.split(key, 10)

    def linear(kw, kb, fan_in, fan_out):
        bound = 1.0 / jnp.sqrt(fan_in)
        w = jax.random.uniform(kw, (fan_in, fan_out), jnp.float32, -bound, bound)
        b = jax.random.uniform(kb, (1, fan_out), jnp.float32, -bound, bound)
        return w, b

    wa1, ba1 = linear(ks[0], ks[1], s_dim, hidden)
    wmu, bmu = linear(ks[2], ks[3], hidden, a_dim)
    wsg, bsg = linear(ks[4], ks[5], hidden, a_dim)
    wc1, bc1 = linear(ks[6], ks[7], s_dim, hidden)
    wv, bv = linear(ks[8], ks[9], hidden, 1)

    return dict(wa1=wa1, ba1=ba1, wmu=wmu, bmu=bmu, wsg=wsg, bsg=bsg,
                wc1=wc1, bc1=bc1, wv=wv, bv=bv)


def net_forward_ref(x, p):
    a1 = _relu6(x @ p["wa1"] + p["ba1"])
    mu = 2.0 * jnp.tanh(a1 @ p["wmu"] + p["bmu"])
    sigma = _softplus(a1 @ p["wsg"] + p["bsg"]) + 0.001
    c1 = _relu6(x @ p["wc1"] + p["bc1"])
    values = c1 @ p["wv"] + p["bv"]
    return mu, sigma, values


if __name__ == "__main__":
    key = jax.random.PRNGKey(0)
    k_x, k_x2, k_p = jax.random.split(key, 3)

    s_dim, a_dim = 8, 4
    params = init_params(k_p, s_dim, a_dim)
    packed = pack_params(params)   # f32; pass weight_dtype=jnp.bfloat16 on v6e/v7x if drift OK

    # Small demo batch (single tile).
    B = 8
    x = jax.random.normal(k_x, (B, s_dim), jnp.float32)
    mu, sigma, values = net_forward(x, packed)
    jax.block_until_ready((mu, sigma, values))
    mu_r, sigma_r, values_r = net_forward_ref(x, params)
    assert mu.shape == (B, a_dim) and sigma.shape == (B, a_dim) and values.shape == (B, 1)
    assert jnp.allclose(mu, mu_r, atol=1e-5), "mu mismatch"
    assert jnp.allclose(sigma, sigma_r, atol=1e-5), "sigma mismatch"
    assert jnp.allclose(values, values_r, atol=1e-5), "values mismatch"

    # Non-aligned batch exercising the multi-tile / low-waste padding path
    # (2 grid steps -> engages both TCs on v7x).
    B2 = 300
    x2 = jax.random.normal(k_x2, (B2, s_dim), jnp.float32)
    mu2, sigma2, values2 = net_forward(x2, packed)
    jax.block_until_ready((mu2, sigma2, values2))
    mu2_r, sigma2_r, values2_r = net_forward_ref(x2, params)
    assert mu2.shape == (B2, a_dim) and sigma2.shape == (B2, a_dim) and values2.shape == (B2, 1)
    assert jnp.allclose(mu2, mu2_r, atol=1e-5), "mu mismatch (B=300)"
    assert jnp.allclose(sigma2, sigma2_r, atol=1e-5), "sigma mismatch (B=300)"
    assert jnp.allclose(values2, values2_r, atol=1e-5), "values mismatch (B=300)"

    print("KERNEL_OK")
</pallas_src>

<mosaic_0001>
module attributes {stable_mosaic.version = 11 : i64} {
  func.func @_net_kernel(%arg0: i32, %arg1: memref<8x8xf32, #tpu.memory_space<vmem>>, %arg2: memref<8x512xf32, #tpu.memory_space<vmem>>, %arg3: memref<1x512xf32, #tpu.memory_space<vmem>>, %arg4: memref<512x128xf32, #tpu.memory_space<vmem>>, %arg5: memref<1x128xf32, #tpu.memory_space<vmem>>, %arg6: memref<8x128xf32, #tpu.memory_space<vmem>>) attributes {dimension_semantics = [#tpu.dimension_semantics<parallel>], iteration_bounds = array<i64: 1>, scalar_prefetch = 0 : i64, scratch_operands = 0 : i64, tpu.core_type = #tpu.core_type<tc>, window_params = [{transform_indices = @transform_0, window_bounds = array<i64: 8, 8>}, {pipeline_mode = #tpu.pipeline_mode<synchronous>, transform_indices = @transform_1, window_bounds = array<i64: 8, 512>}, {pipeline_mode = #tpu.pipeline_mode<synchronous>, transform_indices = @transform_2, window_bounds = array<i64: 1, 512>}, {pipeline_mode = #tpu.pipeline_mode<synchronous>, transform_indices = @transform_3, window_bounds = array<i64: 512, 128>}, {pipeline_mode = #tpu.pipeline_mode<synchronous>, transform_indices = @transform_4, window_bounds = array<i64: 1, 128>}, {transform_indices = @transform_5, window_bounds = array<i64: 8, 128>}]} {
    %c0 = arith.constant 0 : index
    %c0_0 = arith.constant 0 : index
    %0 = vector.load %arg1[%c0, %c0_0] : memref<8x8xf32, #tpu.memory_space<vmem>>, vector<8x8xf32>
    %c0_1 = arith.constant 0 : index
    %c0_2 = arith.constant 0 : index
    %1 = vector.load %arg2[%c0_1, %c0_2] : memref<8x512xf32, #tpu.memory_space<vmem>>, vector<8x512xf32>
    %cst = arith.constant dense<0.000000e+00> : vector<8x512xf32>
    %2 = tpu.matmul %0, %1, %cst {dimension_numbers = #tpu.dot_dimension_numbers<[1], [0], [0], [1], [0, 0, 1, 1], [], []>} : vector<8x8xf32>, vector<8x512xf32>, vector<8x512xf32> -> vector<8x512xf32>
    %c0_3 = arith.constant 0 : index
    %c0_4 = arith.constant 0 : index
    %3 = vector.load %arg3[%c0_3, %c0_4] : memref<1x512xf32, #tpu.memory_space<vmem>>, vector<1x512xf32>
    %4 = vector.broadcast %3 : vector<1x512xf32> to vector<8x512xf32>
    %5 = arith.addf %2, %4 : vector<8x512xf32>
    %cst_5 = arith.constant 0.000000e+00 : f32
    %cst_6 = arith.constant 6.000000e+00 : f32
    %6 = vector.broadcast %cst_5 : f32 to vector<8x512xf32>
    %7 = arith.maximumf %6, %5 : vector<8x512xf32>
    %8 = vector.broadcast %cst_6 : f32 to vector<8x512xf32>
    %9 = arith.minimumf %8, %7 : vector<8x512xf32>
    %c0_7 = arith.constant 0 : index
    %c0_8 = arith.constant 0 : index
    %10 = vector.load %arg4[%c0_7, %c0_8] : memref<512x128xf32, #tpu.memory_space<vmem>>, vector<512x128xf32>
    %cst_9 = arith.constant dense<0.000000e+00> : vector<8x128xf32>
    %11 = tpu.matmul %9, %10, %cst_9 {dimension_numbers = #tpu.dot_dimension_numbers<[1], [0], [0], [1], [0, 0, 1, 1], [], []>} : vector<8x512xf32>, vector<512x128xf32>, vector<8x128xf32> -> vector<8x128xf32>
    %c0_10 = arith.constant 0 : index
    %c0_11 = arith.constant 0 : index
    %12 = vector.load %arg5[%c0_10, %c0_11] : memref<1x128xf32, #tpu.memory_space<vmem>>, vector<1x128xf32>
    %13 = vector.broadcast %12 : vector<1x128xf32> to vector<8x128xf32>
    %14 = arith.addf %11, %13 : vector<8x128xf32>
    %15 = tpu.iota {dimensions = array<i32: 1>} : vector<1x128xi32>
    %c8_i32 = arith.constant 8 : i32
    %16 = vector.broadcast %c8_i32 : i32 to vector<1x128xi32>
    %17 = arith.cmpi slt, %15, %16 : vector<1x128xi32>
    %cst_12 = arith.constant 0.000000e+00 : f32
    %18 = vector.broadcast %cst_12 : f32 to vector<8x128xf32>
    %19 = arith.maximumf %14, %18 : vector<8x128xf32>
    %20 = math.absf %14 : vector<8x128xf32>
    %cst_13 = arith.constant 0.000000e+00 : f32
    %21 = vector.broadcast %cst_13 : f32 to vector<8x128xf32>
    %22 = arith.subf %21, %20 : vector<8x128xf32>
    %23 = math.exp %22 : vector<8x128xf32>
    %24 = math.log1p %23 : vector<8x128xf32>
    %25 = arith.addf %19, %24 : vector<8x128xf32>
    %cst_14 = arith.constant 1.000000e-03 : f32
    %26 = vector.broadcast %cst_14 : f32 to vector<8x128xf32>
    %27 = arith.addf %25, %26 : vector<8x128xf32>
    %28 = vector.shape_cast %17 : vector<1x128xi1> to vector<1x128xi1>
    %29 = vector.broadcast %28 : vector<1x128xi1> to vector<8x128xi1>
    %30 = arith.select %29, %27, %14 : vector<8x128xi1>, vector<8x128xf32>
    %c4_i32 = arith.constant 4 : i32
    %31 = vector.broadcast %c4_i32 : i32 to vector<1x128xi32>
    %32 = arith.cmpi slt, %15, %31 : vector<1x128xi32>
    %33 = math.tanh %14 : vector<8x128xf32>
    %cst_15 = arith.constant 2.000000e+00 : f32
    %34 = vector.broadcast %cst_15 : f32 to vector<8x128xf32>
    %35 = arith.mulf %34, %33 : vector<8x128xf32>
    %36 = vector.shape_cast %32 : vector<1x128xi1> to vector<1x128xi1>
    %37 = vector.broadcast %36 : vector<1x128xi1> to vector<8x128xi1>
    %38 = arith.select %37, %35, %30 : vector<8x128xi1>, vector<8x128xf32>
    %c0_16 = arith.constant 0 : index
    %c0_17 = arith.constant 0 : index
    %39 = vector.load %arg6[%c0_16, %c0_17] : memref<8x128xf32, #tpu.memory_space<vmem>>, vector<8x128xf32>
    tpu.vector_store %arg6[%c0_16, %c0_17], %38 {strides = array<i32>} : memref<8x128xf32, #tpu.memory_space<vmem>>, vector<8x128xf32>,
    return
  }
  func.func @transform_0(%arg0: i32) -> (i32, i32) {
    %c0_i32 = arith.constant 0 : i32
    %c0_i32_0 = arith.constant 0 : i32
    return %arg0, %c0_i32 : i32, i32
  }
  func.func @transform_1(%arg0: i32) -> (i32, i32) {
    %c0_i32 = arith.constant 0 : i32
    %c0_i32_0 = arith.constant 0 : i32
    %c0_i32_1 = arith.constant 0 : i32
    return %c0_i32, %c0_i32_0 : i32, i32
  }
  func.func @transform_2(%arg0: i32) -> (i32, i32) {
    %c0_i32 = arith.constant 0 : i32
    %c0_i32_0 = arith.constant 0 : i32
    %c0_i32_1 = arith.constant 0 : i32
    return %c0_i32, %c0_i32_0 : i32, i32
  }
  func.func @transform_3(%arg0: i32) -> (i32, i32) {
    %c0_i32 = arith.constant 0 : i32
    %c0_i32_0 = arith.constant 0 : i32
    %c0_i32_1 = arith.constant 0 : i32
    return %c0_i32, %c0_i32_0 : i32, i32
  }
  func.func @transform_4(%arg0: i32) -> (i32, i32) {
    %c0_i32 = arith.constant 0 : i32
    %c0_i32_0 = arith.constant 0 : i32
    %c0_i32_1 = arith.constant 0 : i32
    return %c0_i32, %c0_i32_0 : i32, i32
  }
  func.func @transform_5(%arg0: i32) -> (i32, i32) {
    %c0_i32 = arith.constant 0 : i32
    %c0_i32_0 = arith.constant 0 : i32
    return %arg0, %c0_i32 : i32, i32
  }
}

</mosaic_0001>

<llo_original>
// kernel: tpu_custom_call.1
$region0: #{tpu_custom_call.1}
  #allocation0 [shape = 'u32[]', space=smem, size = 0x4, offset = 0x4, fixed_abs, tag = 'smem constant byte address 0x4 - core index']
  #allocation1 [shape = 'u32[144,128]{1,0:T(1,128)}', space=vmem, size = 0x12000, scoped, tag = 'internal scratch']
  %s0 = inlined_call_operand.hbm [shape: f32[8,8], index: 0, kind: input, shape index: {}]
  %s1 = inlined_call_operand.hbm [shape: f32[8,512], index: 1, kind: input, shape index: {}]
  %s2 = inlined_call_operand.hbm [shape: f32[1,512], index: 2, kind: input, shape index: {}]
  %s3 = inlined_call_operand.hbm [shape: f32[512,128], index: 3, kind: input, shape index: {}]
  %s4 = inlined_call_operand.vmem [shape: f32[1,128], index: 4, kind: input, shape index: {}]
  %s5 = inlined_call_operand.hbm [shape: f32[8,128], index: 5, kind: output, shape index: {}]
  %s6 = sld [smem:[#allocation0]]
  $region46: #{tpu_custom_call.1} parent=0
    _
  %s8 = ssub.s32 1, %s6
  %s9 = scalar_select 0, %s8, %s6
  $region1: #{tpu_custom_call.1} parent=0
    #allocation2 [shape = 'u8[4096]{0}', space=vmem, size = 0x1000, scoped, tag = 'input window, operand 0, single buffered']
    #allocation3 [shape = 's32[1]{0}', space=sflag, size = 0x4, scoped, tag = 'scoped memory for tpu_custom_call.1']
    #allocation4 [shape = 's32[1]{0}', space=sflag, size = 0x4, scoped, tag = 'scoped memory for tpu_custom_call.1']
    #allocation5 [shape = 'u8[16384]{0}', space=vmem, size = 0x4000, scoped, tag = 'input window, operand 1, single buffered']
    #allocation6 [shape = 's32[1]{0}', space=sflag, size = 0x4, scoped, tag = 'scoped memory for tpu_custom_call.1']
    #allocation7 [shape = 'u8[2048]{0}', space=vmem, size = 0x800, scoped, tag = 'input window, operand 2, single buffered']
    #allocation8 [shape = 'u8[262144]{0}', space=vmem, size = 0x40000, scoped, tag = 'input window, operand 3, single buffered']
    #allocation9 [shape = 's32[1]{0}', space=sflag, size = 0x4, scoped, tag = 'scoped memory for tpu_custom_call.1']
    #allocation10 [shape = 'u8[4096]{0}', space=vmem, size = 0x1000, scoped, tag = 'output window, operand 0, single buffered']
    %10 = vsyncpa [#allocation3], 0
    %11 = vsyncpa [#allocation6], 0
    %12 = vsyncpa [#allocation9], 0
    %13 = vsyncpa [#allocation4], 0
    // Predicated region
    $region2: #{tpu_custom_call.1} parent=1 // pred_check
      _
    $region3: #{tpu_custom_call.1} parent=1 // pred_check_branch
      %15 = sbr.rel (0) target = $region5
    $region4: #{tpu_custom_call.1} parent=1 // pred_region
      %s17 = ssub.s32 128, 128
      %18 = vsyncadd [#allocation3], %s17
      %s20 = sshll.u32 [#allocation2], 4
      %s21 = int_to_ptr.vmem [resolvable:$true] %s20
      %23 = dma.hbm_to_vmem [thread:$0]  %s0, 128, %s21, [#allocation3]
    $region5: #{tpu_custom_call.1} parent=1 // pred_fallthru
      _
    // Predicated region
    $region6: #{tpu_custom_call.1} parent=1 // pred_check
      _
    $region7: #{tpu_custom_call.1} parent=1 // pred_check_branch
      %25 = sbr.rel (0) target = $region9
    $region8: #{tpu_custom_call.1} parent=1 // pred_region
      %s27 = ssub.s32 512, 512
      %28 = vsyncadd [#allocation6], %s27
      %s30 = sshll.u32 [#allocation5], 4
      %s31 = int_to_ptr.vmem [resolvable:$true] %s30
      %33 = dma.hbm_to_vmem [thread:$0]  %s1, 512, %s31, [#allocation6]
    $region9: #{tpu_custom_call.1} parent=1 // pred_fallthru
      _
    // Predicated region
    $region10: #{tpu_custom_call.1} parent=1 // pred_check
      _
    $region11: #{tpu_custom_call.1} parent=1 // pred_check_branch
      %35 = sbr.rel (0) target = $region13
    $region12: #{tpu_custom_call.1} parent=1 // pred_region
      %s37 = ssub.s32 64, 64
      %38 = vsyncadd [#allocation6], %s37
      %s40 = sshll.u32 [#allocation7], 4
      %s41 = int_to_ptr.vmem [resolvable:$true] %s40
      %43 = dma.hbm_to_vmem [thread:$0]  %s2, 64, %s41, [#allocation6]
    $region13: #{tpu_custom_call.1} parent=1 // pred_fallthru
      _
    // Predicated region
    $region14: #{tpu_custom_call.1} parent=1 // pred_check
      _
    $region15: #{tpu_custom_call.1} parent=1 // pred_check_branch
      %45 = sbr.rel (0) target = $region17
    $region16: #{tpu_custom_call.1} parent=1 // pred_region
      %s47 = ssub.s32 8192, 8192
      %48 = vsyncadd [#allocation9], %s47
      %s49 = sshll.u32 [#allocation8], 4
      %s50 = int_to_ptr.vmem [resolvable:$true] %s49
      %55 = dma.hbm_to_vmem [thread:$0]  %s3, 8192, %s50, [#allocation9], 128, 128, 8
    $region17: #{tpu_custom_call.1} parent=1 // pred_fallthru
      _
    // Predicated region
    $region18: #{tpu_custom_call.1} parent=1 // pred_check
      _
    $region19: #{tpu_custom_call.1} parent=1 // pred_check_branch
      %57 = sbr.rel (0) target = $region21
    $region20: #{tpu_custom_call.1} parent=1 // pred_region
      _
    $region21: #{tpu_custom_call.1} parent=1 // pred_fallthru
      _
    // Predicated region
    $region22: #{tpu_custom_call.1} parent=1 // pred_check
      _
    $region23: #{tpu_custom_call.1} parent=1 // pred_check_branch
      %59 = sbr.rel (0) target = $region25
    $region24: #{tpu_custom_call.1} parent=1 // pred_region
      %60 = dma.done [#allocation3], 128
    $region25: #{tpu_custom_call.1} parent=1 // pred_fallthru
      _
    // Predicated region
    $region26: #{tpu_custom_call.1} parent=1 // pred_check
      _
    $region27: #{tpu_custom_call.1} parent=1 // pred_check_branch
      %62 = sbr.rel (0) target = $region29
    $region28: #{tpu_custom_call.1} parent=1 // pred_region
      %63 = dma.done [#allocation6], 512
    $region29: #{tpu_custom_call.1} parent=1 // pred_fallthru
      _
    // Predicated region
    $region30: #{tpu_custom_call.1} parent=1 // pred_check
      _
    $region31: #{tpu_custom_call.1} parent=1 // pred_check_branch
      %65 = sbr.rel (0) target = $region33
    $region32: #{tpu_custom_call.1} parent=1 // pred_region
      %66 = dma.done [#allocation6], 64
    $region33: #{tpu_custom_call.1} parent=1 // pred_fallthru
      _
    // Predicated region
    $region34: #{tpu_custom_call.1} parent=1 // pred_check
      _
    $region35: #{tpu_custom_call.1} parent=1 // pred_check_branch
      %68 = sbr.rel (0) target = $region37
    $region36: #{tpu_custom_call.1} parent=1 // pred_region
      %69 = dma.done [#allocation9], 8192
    $region37: #{tpu_custom_call.1} parent=1 // pred_fallthru
      _
    %v70 = vld [vmem:[#allocation2] sm:$0xff]
    %v71 = vld [vmem:[#allocation5] sm:$0xff]
    %v72 = vld [vmem:[#allocation5 + $0x8] sm:$0xff]
    %v73 = vld [vmem:[#allocation5 + $0x10] sm:$0xff]
    %v74 = vld [vmem:[#allocation5 + $0x18] sm:$0xff]
    %v75 = vld [vmem:[#allocation7] sm:$0xf]
    %v77 = vlaneseq
    %v78 = vshrl.u32 %v77, 7
    %v79 = vsub.s32 0, %v78
    %v80 = vrot.slane %v75, %v79
    %v81 = vlaneseq
    %v82 = vshrl.u32 %v81, 7
    %v83 = vsub.s32 1, %v82
    %v84 = vrot.slane %v75, %v83
    %v85 = vlaneseq
    %v86 = vshrl.u32 %v85, 7
    %v87 = vsub.s32 2, %v86
    %v88 = vrot.slane %v75, %v87
    %v89 = vlaneseq
    %v90 = vshrl.u32 %v89, 7
    %v91 = vsub.s32 3, %v90
    %v92 = vrot.slane %v75, %v91
    %vm97 = vcmask 64512
    %v99 = vsel %vm97, %v70, 0
    %101 = vmatprep.subr.mxu0 0.0
    %102 = vmatpush1.msra.mxu0 0.0
    %103 = vmatprep.subr.mxu0 0.0
    %104 = vmatpush1.msra.mxu0 0.0
    %105 = vmatprep.subr.mxu0 0.0
    %106 = vmatpush1.msra.mxu0 0.0
    %107 = vmatprep.subr.mxu0 0.0
    %108 = vmatpush1.msra.mxu0 0.0
    %109 = vmatprep.subr.mxu0 0.0
    %110 = vmatpush1.msra.mxu0 0.0
    %111 = vmatprep.subr.mxu0 0.0
    %112 = vmatpush1.msra.mxu0 0.0
    %113 = vmatprep.subr.mxu0 0.0
    %114 = vmatpush1.msra.mxu0 0.0
    %115 = vmatprep.subr.mxu0 0.0
    %116 = vmatpush1.msra.mxu0 0.0
    %117 = vmatprep.subr.mxu0 0.0
    %118 = vmatpush1.msra.mxu0 0.0
    %119 = vmatprep.subr.mxu0 0.0
    %120 = vmatpush1.msra.mxu0 0.0
    %121 = vmatprep.subr.mxu0 0.0
    %122 = vmatpush1.msra.mxu0 0.0
    %123 = vmatprep.subr.mxu0 0.0
    %124 = vmatpush1.msra.mxu0 0.0
    %125 = vmatprep.subr.mxu0 0.0
    %126 = vmatpush1.msra.mxu0 0.0
    %127 = vmatprep.subr.mxu0 0.0
    %128 = vmatpush1.msra.mxu0 0.0
    %129 = vmatprep.subr.mxu0 0.0
    %130 = vmatpush1.msra.mxu0 0.0
    %131 = vmatprep.subr.mxu0 %v72
    %132 = vmatpush1.msra.mxu0 %v71
    %133 = vmatprep.subr.mxu0 0.0
    %134 = vmatpush2.msra.mxu0 0.0
    %135 = vmatprep.subr.mxu0 0.0
    %136 = vmatpush2.msra.mxu0 0.0
    %137 = vmatprep.subr.mxu0 0.0
    %138 = vmatpush2.msra.mxu0 0.0
    %139 = vmatprep.subr.mxu0 0.0
    %140 = vmatpush2.msra.mxu0 0.0
    %141 = vmatprep.subr.mxu0 0.0
    %142 = vmatpush2.msra.mxu0 0.0
    %143 = vmatprep.subr.mxu0 0.0
    %144 = vmatpush2.msra.mxu0 0.0
    %145 = vmatprep.subr.mxu0 0.0
    %146 = vmatpush2.msra.mxu0 0.0
    %147 = vmatprep.subr.mxu0 0.0
    %148 = vmatpush2.msra.mxu0 0.0
    %149 = vmatprep.subr.mxu0 0.0
    %150 = vmatpush2.msra.mxu0 0.0
    %151 = vmatprep.subr.mxu0 0.0
    %152 = vmatpush2.msra.mxu0 0.0
    %153 = vmatprep.subr.mxu0 0.0
    %154 = vmatpush2.msra.mxu0 0.0
    %155 = vmatprep.subr.mxu0 0.0
    %156 = vmatpush2.msra.mxu0 0.0
    %157 = vmatprep.subr.mxu0 0.0
    %158 = vmatpush2.msra.mxu0 0.0
    %159 = vmatprep.subr.mxu0 0.0
    %160 = vmatpush2.msra.mxu0 0.0
    %161 = vmatprep.subr.mxu0 0.0
    %162 = vmatpush2.msra.mxu0 0.0
    %163 = vmatprep.subr.mxu0 0.0
    %164 = vmatpush2.msra.mxu0 0.0
    %165 = vmatprep.mubr.f32.mxu0 0.0
    %166 = vmatmul.mubr.f32.gmra.mxu0 %v99
    %v167 = vpop.f32.mrf.mxu0
    %v168 = vadd.f32 %v80, %v167
    %v169 = vpop.f32.mrf.mxu0
    %v170 = vadd.f32 %v84, %v169
    %171 = vdwg.mxu0
    %172 = vmatprep.subr.mxu0 0.0
    %173 = vmatpush1.msra.mxu0 0.0
    %174 = vmatprep.subr.mxu0 0.0
    %175 = vmatpush1.msra.mxu0 0.0
    %176 = vmatprep.subr.mxu0 0.0
    %177 = vmatpush1.msra.mxu0 0.0
    %178 = vmatprep.subr.mxu0 0.0
    %179 = vmatpush1.msra.mxu0 0.0
    %180 = vmatprep.subr.mxu0 0.0
    %181 = vmatpush1.msra.mxu0 0.0
    %182 = vmatprep.subr.mxu0 0.0
    %183 = vmatpush1.msra.mxu0 0.0
    %184 = vmatprep.subr.mxu0 0.0
    %185 = vmatpush1.msra.mxu0 0.0
    %186 = vmatprep.subr.mxu0 0.0
    %187 = vmatpush1.msra.mxu0 0.0
    %188 = vmatprep.subr.mxu0 0.0
    %189 = vmatpush1.msra.mxu0 0.0
    %190 = vmatprep.subr.mxu0 0.0
    %191 = vmatpush1.msra.mxu0 0.0
    %192 = vmatprep.subr.mxu0 0.0
    %193 = vmatpush1.msra.mxu0 0.0
    %194 = vmatprep.subr.mxu0 0.0
    %195 = vmatpush1.msra.mxu0 0.0
    %196 = vmatprep.subr.mxu0 0.0
    %197 = vmatpush1.msra.mxu0 0.0
    %198 = vmatprep.subr.mxu0 0.0
    %199 = vmatpush1.msra.mxu0 0.0
    %200 = vmatprep.subr.mxu0 0.0
    %201 = vmatpush1.msra.mxu0 0.0
    %202 = vmatprep.subr.mxu0 %v74
    %203 = vmatpush1.msra.mxu0 %v73
    %204 = vmatprep.subr.mxu0 0.0
    %205 = vmatpush2.msra.mxu0 0.0
    %206 = vmatprep.subr.mxu0 0.0
    %207 = vmatpush2.msra.mxu0 0.0
    %208 = vmatprep.subr.mxu0 0.0
    %209 = vmatpush2.msra.mxu0 0.0
    %210 = vmatprep.subr.mxu0 0.0
    %211 = vmatpush2.msra.mxu0 0.0
    %212 = vmatprep.subr.mxu0 0.0
    %213 = vmatpush2.msra.mxu0 0.0
    %214 = vmatprep.subr.mxu0 0.0
    %215 = vmatpush2.msra.mxu0 0.0
    %216 = vmatprep.subr.mxu0 0.0
    %217 = vmatpush2.msra.mxu0 0.0
    %218 = vmatprep.subr.mxu0 0.0
    %219 = vmatpush2.msra.mxu0 0.0
    %220 = vmatprep.subr.mxu0 0.0
    %221 = vmatpush2.msra.mxu0 0.0
    %222 = vmatprep.subr.mxu0 0.0
    %223 = vmatpush2.msra.mxu0 0.0
    %224 = vmatprep.subr.mxu0 0.0
    %225 = vmatpush2.msra.mxu0 0.0
    %226 = vmatprep.subr.mxu0 0.0
    %227 = vmatpush2.msra.mxu0 0.0
    %228 = vmatprep.subr.mxu0 0.0
    %229 = vmatpush2.msra.mxu0 0.0
    %230 = vmatprep.subr.mxu0 0.0
    %231 = vmatpush2.msra.mxu0 0.0
    %232 = vmatprep.subr.mxu0 0.0
    %233 = vmatpush2.msra.mxu0 0.0
    %234 = vmatprep.subr.mxu0 0.0
    %235 = vmatpush2.msra.mxu0 0.0
    %236 = vmatprep.mubr.f32.mxu0 0.0
    %237 = vmatmul.mubr.f32.gmra.mxu0 %v99
    %v238 = vpop.f32.mrf.mxu0
    %v239 = vadd.f32 %v88, %v238
    %v240 = vpop.f32.mrf.mxu0
    %v241 = vadd.f32 %v92, %v240
    %242 = vdwg.mxu0
    %v243 = vmax.f32 %v168, 0.0
    %v244 = vmax.f32 %v170, 0.0
    %v245 = vmax.f32 %v239, 0.0
    %v246 = vmax.f32 %v241, 0.0
    %v247 = vmin.f32 %v243, 6.0
    %v248 = vmin.f32 %v244, 6.0
    %v249 = vmin.f32 %v245, 6.0
    %v250 = vmin.f32 %v246, 6.0
    %v251 = vld [vmem:[#allocation8] sm:$0xff]
    %v252 = vld [vmem:[#allocation8 + $0x8] sm:$0xff]
    %v253 = vld [vmem:[#allocation8 + $0x10] sm:$0xff]
    %v254 = vld [vmem:[#allocation8 + $0x18] sm:$0xff]
    %v255 = vld [vmem:[#allocation8 + $0x20] sm:$0xff]
    %v256 = vld [vmem:[#allocation8 + $0x28] sm:$0xff]
    %v257 = vld [vmem:[#allocation8 + $0x30] sm:$0xff]
    %v258 = vld [vmem:[#allocation8 + $0x38] sm:$0xff]
    %v259 = vld [vmem:[#allocation8 + $0x40] sm:$0xff]
    %v260 = vld [vmem:[#allocation8 + $0x48] sm:$0xff]
    %v261 = vld [vmem:[#allocation8 + $0x50] sm:$0xff]
    %v262 = vld [vmem:[#allocation8 + $0x58] sm:$0xff]
    %v263 = vld [vmem:[#allocation8 + $0x60] sm:$0xff]
    %v264 = vld [vmem:[#allocation8 + $0x68] sm:$0xff]
    %v265 = vld [vmem:[#allocation8 + $0x70] sm:$0xff]
    %v266 = vld [vmem:[#allocation8 + $0x78] sm:$0xff]
    %v267 = vld [vmem:[#allocation8 + $0x80] sm:$0xff]
    %v268 = vld [vmem:[#allocation8 + $0x88] sm:$0xff]
    %v269 = vld [vmem:[#allocation8 + $0x90] sm:$0xff]
    %v270 = vld [vmem:[#allocation8 + $0x98] sm:$0xff]
    %v271 = vld [vmem:[#allocation8 + $0xa0] sm:$0xff]
    %v272 = vld [vmem:[#allocation8 + $0xa8] sm:$0xff]
    %v273 = vld [vmem:[#allocation8 + $0xb0] sm:$0xff]
    %v274 = vld [vmem:[#allocation8 + $0xb8] sm:$0xff]
    %v275 = vld [vmem:[#allocation8 + $0xc0] sm:$0xff]
    %v276 = vld [vmem:[#allocation8 + $0xc8] sm:$0xff]
    %v277 = vld [vmem:[#allocation8 + $0xd0] sm:$0xff]
    %v278 = vld [vmem:[#allocation8 + $0xd8] sm:$0xff]
    %v279 = vld [vmem:[#allocation8 + $0xe0] sm:$0xff]
    %v280 = vld [vmem:[#allocation8 + $0xe8] sm:$0xff]
    %v281 = vld [vmem:[#allocation8 + $0xf0] sm:$0xff]
    %v282 = vld [vmem:[#allocation8 + $0xf8] sm:$0xff]
    %v283 = vld [vmem:[#allocation8 + $0x100] sm:$0xff]
    %v284 = vld [vmem:[#allocation8 + $0x108] sm:$0xff]
    %v285 = vld [vmem:[#allocation8 + $0x110] sm:$0xff]
    %v286 = vld [vmem:[#allocation8 + $0x118] sm:$0xff]
    %v287 = vld [vmem:[#allocation8 + $0x120] sm:$0xff]
    %v288 = vld [vmem:[#allocation8 + $0x128] sm:$0xff]
    %v289 = vld [vmem:[#allocation8 + $0x130] sm:$0xff]
    %v290 = vld [vmem:[#allocation8 + $0x138] sm:$0xff]
    %v291 = vld [vmem:[#allocation8 + $0x140] sm:$0xff]
    %v292 = vld [vmem:[#allocation8 + $0x148] sm:$0xff]
    %v293 = vld [vmem:[#allocation8 + $0x150] sm:$0xff]
    %v294 = vld [vmem:[#allocation8 + $0x158] sm:$0xff]
    %v295 = vld [vmem:[#allocation8 + $0x160] sm:$0xff]
    %v296 = vld [vmem:[#allocation8 + $0x168] sm:$0xff]
    %v297 = vld [vmem:[#allocation8 + $0x170] sm:$0xff]
    %v298 = vld [vmem:[#allocation8 + $0x178] sm:$0xff]
    %v299 = vld [vmem:[#allocation8 + $0x180] sm:$0xff]
    %v300 = vld [vmem:[#allocation8 + $0x188] sm:$0xff]
    %v301 = vld [vmem:[#allocation8 + $0x190] sm:$0xff]
    %v302 = vld [vmem:[#allocation8 + $0x198] sm:$0xff]
    %v303 = vld [vmem:[#allocation8 + $0x1a0] sm:$0xff]
    %v304 = vld [vmem:[#allocation8 + $0x1a8] sm:$0xff]
    %v305 = vld [vmem:[#allocation8 + $0x1b0] sm:$0xff]
    %v306 = vld [vmem:[#allocation8 + $0x1b8] sm:$0xff]
    %v307 = vld [vmem:[#allocation8 + $0x1c0] sm:$0xff]
    %v308 = vld [vmem:[#allocation8 + $0x1c8] sm:$0xff]
    %v309 = vld [vmem:[#allocation8 + $0x1d0] sm:$0xff]
    %v310 = vld [vmem:[#allocation8 + $0x1d8] sm:$0xff]
    %v311 = vld [vmem:[#allocation8 + $0x1e0] sm:$0xff]
    %v312 = vld [vmem:[#allocation8 + $0x1e8] sm:$0xff]
    %v313 = vld [vmem:[#allocation8 + $0x1f0] sm:$0xff]
    %v314 = vld [vmem:[#allocation8 + $0x1f8] sm:$0xff]
    %v315 = vld [vmem:[%s4] sm:$0x1]
    %v317 = vlaneseq
    %v318 = vshrl.u32 %v317, 7
    %v319 = vsub.s32 0, %v318
    %v320 = vrot.slane %v315, %v319
    %322 = vmatprep.subr.mxu0 0.0
    %323 = vmatpush1.msra.mxu0 %v266
    %324 = vmatprep.subr.mxu0 0.0
    %325 = vmatpush1.msra.mxu0 %v265
    %326 = vmatprep.subr.mxu0 0.0
    %327 = vmatpush1.msra.mxu0 %v264
    %328 = vmatprep.subr.mxu0 0.0
    %329 = vmatpush1.msra.mxu0 %v263
    %330 = vmatprep.subr.mxu0 0.0
    %331 = vmatpush1.msra.mxu0 %v262
    %332 = vmatprep.subr.mxu0 0.0
    %333 = vmatpush1.msra.mxu0 %v261
    %334 = vmatprep.subr.mxu0 0.0
    %335 = vmatpush1.msra.mxu0 %v260
    %336 = vmatprep.subr.mxu0 0.0
    %337 = vmatpush1.msra.mxu0 %v259
    %338 = vmatprep.subr.mxu0 0.0
    %339 = vmatpush1.msra.mxu0 %v258
    %340 = vmatprep.subr.mxu0 0.0
    %341 = vmatpush1.msra.mxu0 %v257
    %342 = vmatprep.subr.mxu0 0.0
    %343 = vmatpush1.msra.mxu0 %v256
    %344 = vmatprep.subr.mxu0 0.0
    %345 = vmatpush1.msra.mxu0 %v255
    %346 = vmatprep.subr.mxu0 0.0
    %347 = vmatpush1.msra.mxu0 %v254
    %348 = vmatprep.subr.mxu0 0.0
    %349 = vmatpush1.msra.mxu0 %v253
    %350 = vmatprep.subr.mxu0 0.0
    %351 = vmatpush1.msra.mxu0 %v252
    %352 = vmatprep.subr.mxu0 0.0
    %353 = vmatpush1.msra.mxu0 %v251
    %354 = vmatprep.subr.mxu0 0.0
    %355 = vmatpush2.msra.mxu0 %v282
    %356 = vmatprep.subr.mxu0 0.0
    %357 = vmatpush2.msra.mxu0 %v281
    %358 = vmatprep.subr.mxu0 0.0
    %359 = vmatpush2.msra.mxu0 %v280
    %360 = vmatprep.subr.mxu0 0.0
    %361 = vmatpush2.msra.mxu0 %v279
    %362 = vmatprep.subr.mxu0 0.0
    %363 = vmatpush2.msra.mxu0 %v278
    %364 = vmatprep.subr.mxu0 0.0
    %365 = vmatpush2.msra.mxu0 %v277
    %366 = vmatprep.subr.mxu0 0.0
    %367 = vmatpush2.msra.mxu0 %v276
    %368 = vmatprep.subr.mxu0 0.0
    %369 = vmatpush2.msra.mxu0 %v275
    %370 = vmatprep.subr.mxu0 0.0
    %371 = vmatpush2.msra.mxu0 %v274
    %372 = vmatprep.subr.mxu0 0.0
    %373 = vmatpush2.msra.mxu0 %v273
    %374 = vmatprep.subr.mxu0 0.0
    %375 = vmatpush2.msra.mxu0 %v272
    %376 = vmatprep.subr.mxu0 0.0
    %377 = vmatpush2.msra.mxu0 %v271
    %378 = vmatprep.subr.mxu0 0.0
    %379 = vmatpush2.msra.mxu0 %v270
    %380 = vmatprep.subr.mxu0 0.0
    %381 = vmatpush2.msra.mxu0 %v269
    %382 = vmatprep.subr.mxu0 0.0
    %383 = vmatpush2.msra.mxu0 %v268
    %384 = vmatprep.subr.mxu0 0.0
    %385 = vmatpush2.msra.mxu0 %v267
    %386 = vmatprep.mubr.f32.mxu0 %v248
    %387 = vmatmul.mubr.f32.gmra.mxu0 %v247
    %v388 = vpop.f32.mrf.mxu0
    %v389 = vadd.f32 %v320, %v388
    %v390 = vpop.f32.mrf.mxu0
    %391 = vdwg.mxu0
    %392 = vmatprep.subr.mxu0 0.0
    %393 = vmatpush1.msra.mxu0 %v298
    %394 = vmatprep.subr.mxu0 0.0
    %395 = vmatpush1.msra.mxu0 %v297
    %396 = vmatprep.subr.mxu0 0.0
    %397 = vmatpush1.msra.mxu0 %v296
    %398 = vmatprep.subr.mxu0 0.0
    %399 = vmatpush1.msra.mxu0 %v295
    %400 = vmatprep.subr.mxu0 0.0
    %401 = vmatpush1.msra.mxu0 %v294
    %402 = vmatprep.subr.mxu0 0.0
    %403 = vmatpush1.msra.mxu0 %v293
    %404 = vmatprep.subr.mxu0 0.0
    %405 = vmatpush1.msra.mxu0 %v292
    %406 = vmatprep.subr.mxu0 0.0
    %407 = vmatpush1.msra.mxu0 %v291
    %408 = vmatprep.subr.mxu0 0.0
    %409 = vmatpush1.msra.mxu0 %v290
    %410 = vmatprep.subr.mxu0 0.0
    %411 = vmatpush1.msra.mxu0 %v289
    %412 = vmatprep.subr.mxu0 0.0
    %413 = vmatpush1.msra.mxu0 %v288
    %414 = vmatprep.subr.mxu0 0.0
    %415 = vmatpush1.msra.mxu0 %v287
    %416 = vmatprep.subr.mxu0 0.0
    %417 = vmatpush1.msra.mxu0 %v286
    %418 = vmatprep.subr.mxu0 0.0
    %419 = vmatpush1.msra.mxu0 %v285
    %420 = vmatprep.subr.mxu0 0.0
    %421 = vmatpush1.msra.mxu0 %v284
    %422 = vmatprep.subr.mxu0 0.0
    %423 = vmatpush1.msra.mxu0 %v283
    %424 = vmatprep.subr.mxu0 0.0
    %425 = vmatpush2.msra.mxu0 %v314
    %426 = vmatprep.subr.mxu0 0.0
    %427 = vmatpush2.msra.mxu0 %v313
    %428 = vmatprep.subr.mxu0 0.0
    %429 = vmatpush2.msra.mxu0 %v312
    %430 = vmatprep.subr.mxu0 0.0
    %431 = vmatpush2.msra.mxu0 %v311
    %432 = vmatprep.subr.mxu0 0.0
    %433 = vmatpush2.msra.mxu0 %v310
    %434 = vmatprep.subr.mxu0 0.0
    %435 = vmatpush2.msra.mxu0 %v309
    %436 = vmatprep.subr.mxu0 0.0
    %437 = vmatpush2.msra.mxu0 %v308
    %438 = vmatprep.subr.mxu0 0.0
    %439 = vmatpush2.msra.mxu0 %v307
    %440 = vmatprep.subr.mxu0 0.0
    %441 = vmatpush2.msra.mxu0 %v306
    %442 = vmatprep.subr.mxu0 0.0
    %443 = vmatpush2.msra.mxu0 %v305
    %444 = vmatprep.subr.mxu0 0.0
    %445 = vmatpush2.msra.mxu0 %v304
    %446 = vmatprep.subr.mxu0 0.0
    %447 = vmatpush2.msra.mxu0 %v303
    %448 = vmatprep.subr.mxu0 0.0
    %449 = vmatpush2.msra.mxu0 %v302
    %450 = vmatprep.subr.mxu0 0.0
    %451 = vmatpush2.msra.mxu0 %v301
    %452 = vmatprep.subr.mxu0 0.0
    %453 = vmatpush2.msra.mxu0 %v300
    %454 = vmatprep.subr.mxu0 0.0
    %455 = vmatpush2.msra.mxu0 %v299
    %456 = vmatprep.mubr.f32.mxu0 %v250
    %457 = vmatmul.mubr.f32.gmra.mxu0 %v249
    %v458 = vpop.f32.mrf.mxu0
    %v459 = vadd.f32 %v389, %v458
    %v460 = vpop.f32.mrf.mxu0
    %461 = vdwg.mxu0
    %v462 = vlaneseq
    %v463 = vand.u32 %v462, 127
    %vm464 = vcmp.lt.s32.totalorder %v463, 8
    %v465 = vmax.f32 %v459, 0.0
    %v466 = vand.u32 2147483647, %v459
    %v467 = vsub.f32 0.0, %v466
    %v468 = vmul.f32 %v467, 1.442695
    %v469 = vpow.pop %v468
    %v470 = vadd.f32 %v469, 1.0
    %v471 = vlog2.pop %v470
    %v472 = vmul.f32 %v471, 0.6931472
    %v473 = vmul.f32 -0.5, %v469
    %v474 = vadd.f32 %v473, 1.0
    %v475 = vmul.f32 %v474, %v469
    %v476 = vand.u32 2147483647, %v469
    %vm477 = vcmp.lt.f32.partialorder %v476, 0.0004427343
    %v478 = vsel %vm477, %v475, %v472
    %v479 = vadd.f32 %v465, %v478
    %v480 = vadd.f32 %v479, 0.001
    %v481 = vsel %vm464, 1, 0
    %vm482 = vcmp.eq.s32.totalorder %v481, 1
    %v483 = vsel %vm482, %v480, %v459
    %vm484 = vcmp.lt.s32.totalorder %v463, 4
    %v485 = vtanh.pop %v459
    %v486 = vmul.f32 %v485, 2.0
    %v487 = vsel %vm484, 1, 0
    %vm488 = vcmp.eq.s32.totalorder %v487, 1
    %v489 = vsel %vm488, %v486, %v483
    %490 = vst [vmem:[#allocation10] sm:$0xff] %v489
    // Predicated region
    $region38: #{tpu_custom_call.1} parent=1 // pred_check
      _
    $region39: #{tpu_custom_call.1} parent=1 // pred_check_branch
      %492 = sbr.rel (0) target = $region41
    $region40: #{tpu_custom_call.1} parent=1 // pred_region
      %s494 = ssub.s32 128, 128
      %495 = vsyncadd [#allocation4], %s494
      %s497 = sshll.u32 [#allocation10], 4
      %s498 = int_to_ptr.vmem [resolvable:$true] %s497
      %500 = dma.vmem_to_hbm [thread:$0]  %s498, 128, %s5, [#allocation4]
    $region41: #{tpu_custom_call.1} parent=1 // pred_fallthru
      _
    // Predicated region
    $region42: #{tpu_custom_call.1} parent=1 // pred_check
      _
    $region43: #{tpu_custom_call.1} parent=1 // pred_check_branch
      %502 = sbr.rel (0) target = $region45
    $region44: #{tpu_custom_call.1} parent=1 // pred_region
      %503 = dma.done [#allocation4], 128
    $region45: #{tpu_custom_call.1} parent=1 // pred_fallthru
      _
    %504 = vsyncpa [#allocation3], 1
    %505 = vsyncpa [#allocation6], 1
    %506 = vsyncpa [#allocation9], 1
    %507 = vsyncpa [#allocation4], 1

</llo_original>
